<compile_context>
chip_gen: v5e
topology: v5e:2x2
jax: 0.10.0
libtpu: 0.0.40
codegen_flags: <defaults>
</compile_context>

<pallas_src>
import math

import jax
import jax.numpy as jnp
from jax import lax
from jax.experimental import pallas as pl
from jax.experimental.pallas import tpu as pltpu  # noqa: F401  (TPU backend)

# Model sizes (small, consistent with the module's forward semantics).
B = 2            # batch
S = 8            # sequence length
H = 32           # hidden size
F = 64           # FFN intermediate size
NB = 2 * B       # sequences processed by the fused kernel (x1 batch + x2 batch)
R = NB * S       # rows of the flattened activation slab

LN_EPS = 1e-5
COS_EPS = 1e-8                  # PyTorch nn.CosineSimilarity default eps
_SCALE = 1.0 / math.sqrt(H)     # folded into the packed Q weights at pack time
OUT_LANES = 128                 # lane-dense output tile width


def _layer_norm(x, gamma, beta):
    mean = jnp.mean(x, axis=-1, keepdims=True)
    var = jnp.mean((x - mean) ** 2, axis=-1, keepdims=True)
    return (x - mean) * lax.rsqrt(var + LN_EPS) * gamma + beta


# ----------------------------------------------------------------------------
# Fused Pallas kernel: encoder layer for all 2B sequences + CLS cosine head.
# ----------------------------------------------------------------------------
def biencoder_kernel(x_ref, qkvo_ref, ffn_ref, vec_ref, out_ref):
    x = x_ref[...]                                   # (R, H) f32

    # Packed lane-dense projection slab: rows [0,H) = [wq*s | wk | wv | wo],
    # row H = [bq*s | bk | bv | bo].
    w_qkvo = qkvo_ref[0:H, :]                        # (H, 4H) = (32, 128)
    b_qkvo = qkvo_ref[H:H + 1, :]                    # (1, 4H)
    wo = qkvo_ref[0:H, 3 * H:4 * H]                  # (H, H)
    bo = qkvo_ref[H:H + 1, 3 * H:4 * H]              # (1, H)

    # ONE MXU matmul for Q|K|V (the O columns ride along for free in the
    # 128-lane tile); 1/sqrt(H) already folded into the Q columns.
    proj = jnp.dot(x, w_qkvo, preferred_element_type=jnp.float32) + b_qkvo  # (R, 4H)
    q = proj[:, 0:H]
    k = proj[:, H:2 * H]
    v = proj[:, 2 * H:3 * H]

    # Batched per-sequence single-head attention (no (R,R) mask needed).
    q3 = q.reshape(NB, S, H)
    k3 = k.reshape(NB, S, H)
    v3 = v.reshape(NB, S, H)
    scores = jnp.einsum("bqh,bkh->bqk", q3, k3,
                        preferred_element_type=jnp.float32)          # (NB, S, S)
    scores = scores - jnp.max(scores, axis=-1, keepdims=True)
    p = jnp.exp(scores)
    p = p * pl.reciprocal(jnp.sum(p, axis=-1, keepdims=True), approx=True)
    attn3 = jnp.einsum("bqk,bkh->bqh", p, v3,
                       preferred_element_type=jnp.float32)           # (NB, S, H)
    attn = attn3.reshape(R, H)
    attn = jnp.dot(attn, wo, preferred_element_type=jnp.float32) + bo

    g1, be1 = vec_ref[0:1, :], vec_ref[1:2, :]
    b2 = vec_ref[2:3, :]
    g2, be2 = vec_ref[3:4, :], vec_ref[4:5, :]

    h = _layer_norm(x + attn, g1, be1)                                # (R, H)

    # Rows are independent after attention: only CLS rows (row i*S) are needed
    # downstream.  Static, tile-aligned row slices gathered into one (NB, H) tile.
    cls_h = jnp.concatenate([h[i * S:i * S + 1, :] for i in range(NB)], axis=0)

    # Packed FFN slab: rows [0,H) = w1, rows [H,2H) = w2^T, row 2H = b1.
    w1 = ffn_ref[0:H, :]                                              # (H, F)
    w2t = ffn_ref[H:2 * H, :]                                         # (H, F) = w2^T
    b1 = ffn_ref[2 * H:2 * H + 1, :]                                  # (1, F)

    f = jnp.dot(cls_h, w1, preferred_element_type=jnp.float32) + b1   # (NB, F)
    f = jax.nn.gelu(f, approximate=True)   # tanh approx (matches reference below)
    f = lax.dot_general(f, w2t, (((1,), (1,)), ((), ())),
                        preferred_element_type=jnp.float32) + b2      # (NB, H)

    cls = _layer_norm(cls_h + f, g2, be2)                             # (NB, H)

    # Vectorized cosine head: 3 lane reductions + one rsqrt (EUP), one store.
    c1, c2 = cls[0:B, :], cls[B:NB, :]
    dot = jnp.sum(c1 * c2, axis=-1, keepdims=True)                    # (B, 1)
    n1s = jnp.sum(c1 * c1, axis=-1, keepdims=True)
    n2s = jnp.sum(c2 * c2, axis=-1, keepdims=True)
    cos = dot * lax.rsqrt(jnp.maximum(n1s * n2s, COS_EPS * COS_EPS))  # (B, 1)

    # Single lane-dense store; wrapper reads lane 0 of each row.
    out_ref[...] = jnp.broadcast_to(cos, (B, OUT_LANES))


# ----------------------------------------------------------------------------
# Wrapper: one grid-less pallas_call, whole-array VMEM blocks.
# ----------------------------------------------------------------------------
def bi_encoder_forward(x1, x2, packed):
    qkvo, ffn, vecs = packed
    # Layout plumbing only: concat x1/x2 along batch and flatten (batch, seq).
    x_all = jnp.concatenate([x1, x2], axis=0).reshape(R, H)
    row = pl.pallas_call(
        biencoder_kernel,
        out_shape=jax.ShapeDtypeStruct((B, OUT_LANES), jnp.float32),
    )(x_all, qkvo, ffn, vecs)
    return row[:, 0:1]                                                # (B, 1)


# ----------------------------------------------------------------------------
# Deterministic parameter init (synthetic "pretrained" weights) + packing.
# ----------------------------------------------------------------------------
def init_params(key):
    ks = jax.random.split(key, 6)

    def w(k, shape):
        return jax.random.normal(k, shape, jnp.float32) * 0.02

    wq, wk, wv, wo = (w(ks[0], (H, H)), w(ks[1], (H, H)),
                      w(ks[2], (H, H)), w(ks[3], (H, H)))
    bq = bk = bv = bo = jnp.zeros((1, H), jnp.float32)
    g1 = jnp.ones((1, H), jnp.float32); be1 = jnp.zeros((1, H), jnp.float32)
    w1 = w(ks[4], (H, F)); b1 = jnp.zeros((1, F), jnp.float32)
    w2 = w(ks[5], (F, H)); b2 = jnp.zeros((1, H), jnp.float32)
    g2 = jnp.ones((1, H), jnp.float32); be2 = jnp.zeros((1, H), jnp.float32)
    return (wq, bq, wk, bk, wv, bv, wo, bo, g1, be1, w1, b1, w2, b2, g2, be2)


def pack_params(params):
    """Pack 16 parameter arrays into 3 lane-dense slabs (4 kernel inputs incl. x)."""
    (wq, bq, wk, bk, wv, bv, wo, bo, g1, be1, w1, b1, w2, b2, g2, be2) = params
    # 1/sqrt(H) folded into the Q projection at pack time.
    qkvo_w = jnp.concatenate([wq * _SCALE, wk, wv, wo], axis=1)        # (H, 4H)
    qkvo_b = jnp.concatenate([bq * _SCALE, bk, bv, bo], axis=1)        # (1, 4H)
    qkvo = jnp.concatenate([qkvo_w, qkvo_b], axis=0)                   # (33, 128)
    ffn = jnp.concatenate([w1, w2.T, b1], axis=0)                      # (65, 64)
    vecs = jnp.concatenate([g1, be1, b2, g2, be2], axis=0)             # (5, H)
    return (qkvo, ffn, vecs)


# ----------------------------------------------------------------------------
# Pure-JAX reference (for correctness check).
# ----------------------------------------------------------------------------
def _encoder_ref(x, params):
    (wq, bq, wk, bk, wv, bv, wo, bo, g1, be1, w1, b1, w2, b2, g2, be2) = params
    q = x @ wq + bq
    k = x @ wk + bk
    v = x @ wv + bv
    scores = jnp.einsum("bqh,bkh->bqk", q, k) / jnp.sqrt(jnp.float32(H))
    p = jax.nn.softmax(scores, axis=-1)
    attn = jnp.einsum("bqk,bkh->bqh", p, v) @ wo + bo
    h = _layer_norm(x + attn, g1, be1)
    f = jax.nn.gelu(h @ w1 + b1, approximate=True) @ w2 + b2
    return _layer_norm(h + f, g2, be2)


def _bi_encoder_ref(x1, x2, params):
    c1 = _encoder_ref(x1, params)[:, 0, :]
    c2 = _encoder_ref(x2, params)[:, 0, :]
    dot = jnp.sum(c1 * c2, -1, keepdims=True)
    n1 = jnp.linalg.norm(c1, axis=-1, keepdims=True)
    n2 = jnp.linalg.norm(c2, axis=-1, keepdims=True)
    return dot / jnp.maximum(n1 * n2, COS_EPS)


if __name__ == "__main__":
    key = jax.random.PRNGKey(0)
    kp, k1, k2 = jax.random.split(key, 3)
    params = init_params(kp)
    packed = pack_params(params)
    x1 = jax.random.normal(k1, (B, S, H), jnp.float32)
    x2 = jax.random.normal(k2, (B, S, H), jnp.float32)

    fwd = jax.jit(bi_encoder_forward)
    out = fwd(x1, x2, packed)
    jax.block_until_ready(out)

    assert out.shape == (B, 1), out.shape
    ref = _bi_encoder_ref(x1, x2, params)
    assert jnp.allclose(out, ref, rtol=2e-3, atol=2e-3), (out, ref)
    print("KERNEL_OK")
</pallas_src>

<mosaic_0001>
module attributes {stable_mosaic.version = 11 : i64} {
  func.func @biencoder_kernel(%arg0: memref<32x32xf32, #tpu.memory_space<vmem>>, %arg1: memref<33x128xf32, #tpu.memory_space<vmem>>, %arg2: memref<65x64xf32, #tpu.memory_space<vmem>>, %arg3: memref<5x32xf32, #tpu.memory_space<vmem>>, %arg4: memref<2x128xf32, #tpu.memory_space<vmem>>) attributes {dimension_semantics = [], scalar_prefetch = 0 : i64, scratch_operands = 0 : i64, tpu.core_type = #tpu.core_type<tc>} {
    %c0 = arith.constant 0 : index
    %c0_0 = arith.constant 0 : index
    %0 = vector.load %arg0[%c0, %c0_0] : memref<32x32xf32, #tpu.memory_space<vmem>>, vector<32x32xf32>
    %c0_1 = arith.constant 0 : index
    %c0_2 = arith.constant 0 : index
    %1 = vector.load %arg1[%c0_1, %c0_2] : memref<33x128xf32, #tpu.memory_space<vmem>>, vector<32x128xf32>
    %c32 = arith.constant 32 : index
    %c0_3 = arith.constant 0 : index
    %2 = vector.load %arg1[%c32, %c0_3] : memref<33x128xf32, #tpu.memory_space<vmem>>, vector<1x128xf32>
    %c0_4 = arith.constant 0 : index
    %c96 = arith.constant 96 : index
    %3 = vector.load %arg1[%c0_4, %c96] : memref<33x128xf32, #tpu.memory_space<vmem>>, vector<32x32xf32>
    %c32_5 = arith.constant 32 : index
    %c96_6 = arith.constant 96 : index
    %4 = vector.load %arg1[%c32_5, %c96_6] : memref<33x128xf32, #tpu.memory_space<vmem>>, vector<1x32xf32>
    %cst = arith.constant dense<0.000000e+00> : vector<32x128xf32>
    %5 = tpu.matmul %0, %1, %cst {dimension_numbers = #tpu.dot_dimension_numbers<[1], [0], [0], [1], [0, 0, 1, 1], [], []>} : vector<32x32xf32>, vector<32x128xf32>, vector<32x128xf32> -> vector<32x128xf32>
    %6 = vector.broadcast %2 : vector<1x128xf32> to vector<32x128xf32>
    %7 = arith.addf %5, %6 : vector<32x128xf32>
    %8 = vector.extract_strided_slice %7 {offsets = [0, 0], sizes = [32, 32], strides = [1, 1]} : vector<32x128xf32> to vector<32x32xf32>
    %9 = vector.extract_strided_slice %7 {offsets = [0, 32], sizes = [32, 32], strides = [1, 1]} : vector<32x128xf32> to vector<32x32xf32>
    %10 = vector.extract_strided_slice %7 {offsets = [0, 64], sizes = [32, 32], strides = [1, 1]} : vector<32x128xf32> to vector<32x32xf32>
    %11 = vector.shape_cast %8 : vector<32x32xf32> to vector<4x8x32xf32>
    %12 = vector.shape_cast %9 : vector<32x32xf32> to vector<4x8x32xf32>
    %13 = vector.shape_cast %10 : vector<32x32xf32> to vector<4x8x32xf32>
    "tpu.trace_start"() <{level = 10 : i32, message = "bqh,bkh->bqk"}> : () -> ()
    %cst_7 = arith.constant dense<0.000000e+00> : vector<4x8x8xf32>
    %14 = tpu.matmul %11, %12, %cst_7 {dimension_numbers = #tpu.dot_dimension_numbers<[2], [2], [1], [1], [0, 0, 0, 1, 1, 1], [0], [0]>} : vector<4x8x32xf32>, vector<4x8x32xf32>, vector<4x8x8xf32> -> vector<4x8x8xf32>
    "tpu.trace_stop"() : () -> ()
    %cst_8 = arith.constant dense<0xFF800000> : vector<4x8xf32>
    %15 = vector.multi_reduction <maximumf>, %14, %cst_8 [2] : vector<4x8x8xf32> to vector<4x8xf32>
    %16 = vector.shape_cast %15 : vector<4x8xf32> to vector<4x8x1xf32>
    %17 = vector.broadcast %16 : vector<4x8x1xf32> to vector<4x8x8xf32>
    %18 = arith.subf %14, %17 : vector<4x8x8xf32>
    %19 = math.exp %18 : vector<4x8x8xf32>
    %cst_9 = arith.constant dense<0.000000e+00> : vector<4x8xf32>
    %20 = vector.multi_reduction <add>, %19, %cst_9 [2] : vector<4x8x8xf32> to vector<4x8xf32>
    %21 = vector.shape_cast %20 : vector<4x8xf32> to vector<4x8x1xf32>
    %22 = tpu.reciprocal %21 {approx = true} : vector<4x8x1xf32> -> vector<4x8x1xf32>
    %23 = vector.broadcast %22 : vector<4x8x1xf32> to vector<4x8x8xf32>
    %24 = arith.mulf %19, %23 : vector<4x8x8xf32>
    "tpu.trace_start"() <{level = 10 : i32, message = "bqk,bkh->bqh"}> : () -> ()
    %cst_10 = arith.constant dense<0.000000e+00> : vector<4x8x32xf32>
    %25 = tpu.matmul %24, %13, %cst_10 {dimension_numbers = #tpu.dot_dimension_numbers<[2], [1], [1], [2], [0, 0, 0, 1, 1, 2], [0], [0]>} : vector<4x8x8xf32>, vector<4x8x32xf32>, vector<4x8x32xf32> -> vector<4x8x32xf32>
    "tpu.trace_stop"() : () -> ()
    %26 = vector.shape_cast %25 : vector<4x8x32xf32> to vector<32x32xf32>
    %cst_11 = arith.constant dense<0.000000e+00> : vector<32x32xf32>
    %27 = tpu.matmul %26, %3, %cst_11 {dimension_numbers = #tpu.dot_dimension_numbers<[1], [0], [0], [1], [0, 0, 1, 1], [], []>} : vector<32x32xf32>, vector<32x32xf32>, vector<32x32xf32> -> vector<32x32xf32>
    %28 = vector.broadcast %4 : vector<1x32xf32> to vector<32x32xf32>
    %29 = arith.addf %27, %28 : vector<32x32xf32>
    %c0_12 = arith.constant 0 : index
    %c0_13 = arith.constant 0 : index
    %30 = vector.load %arg3[%c0_12, %c0_13] : memref<5x32xf32, #tpu.memory_space<vmem>>, vector<1x32xf32>
    %c1 = arith.constant 1 : index
    %c0_14 = arith.constant 0 : index
    %31 = vector.load %arg3[%c1, %c0_14] : memref<5x32xf32, #tpu.memory_space<vmem>>, vector<1x32xf32>
    %c2 = arith.constant 2 : index
    %c0_15 = arith.constant 0 : index
    %32 = vector.load %arg3[%c2, %c0_15] : memref<5x32xf32, #tpu.memory_space<vmem>>, vector<1x32xf32>
    %c3 = arith.constant 3 : index
    %c0_16 = arith.constant 0 : index
    %33 = vector.load %arg3[%c3, %c0_16] : memref<5x32xf32, #tpu.memory_space<vmem>>, vector<1x32xf32>
    %c4 = arith.constant 4 : index
    %c0_17 = arith.constant 0 : index
    %34 = vector.load %arg3[%c4, %c0_17] : memref<5x32xf32, #tpu.memory_space<vmem>>, vector<1x32xf32>
    %35 = arith.addf %0, %29 : vector<32x32xf32>
    %cst_18 = arith.constant dense<0.000000e+00> : vector<32xf32>
    %36 = vector.multi_reduction <add>, %35, %cst_18 [1] : vector<32x32xf32> to vector<32xf32>
    %37 = vector.shape_cast %36 : vector<32xf32> to vector<32x1xf32>
    %cst_19 = arith.constant 3.200000e+01 : f32
    %38 = vector.broadcast %cst_19 : f32 to vector<32x1xf32>
    %39 = arith.divf %37, %38 : vector<32x1xf32>
    %40 = vector.broadcast %39 : vector<32x1xf32> to vector<32x32xf32>
    %41 = arith.subf %35, %40 : vector<32x32xf32>
    %42 = arith.mulf %41, %41 : vector<32x32xf32>
    %cst_20 = arith.constant dense<0.000000e+00> : vector<32xf32>
    %43 = vector.multi_reduction <add>, %42, %cst_20 [1] : vector<32x32xf32> to vector<32xf32>
    %44 = vector.shape_cast %43 : vector<32xf32> to vector<32x1xf32>
    %cst_21 = arith.constant 3.200000e+01 : f32
    %45 = vector.broadcast %cst_21 : f32 to vector<32x1xf32>
    %46 = arith.divf %44, %45 : vector<32x1xf32>
    %47 = vector.broadcast %39 : vector<32x1xf32> to vector<32x32xf32>
    %48 = arith.subf %35, %47 : vector<32x32xf32>
    %cst_22 = arith.constant 9.99999974E-6 : f32
    %49 = vector.broadcast %cst_22 : f32 to vector<32x1xf32>
    %50 = arith.addf %46, %49 : vector<32x1xf32>
    %51 = math.rsqrt %50 : vector<32x1xf32>
    %52 = vector.broadcast %51 : vector<32x1xf32> to vector<32x32xf32>
    %53 = arith.mulf %48, %52 : vector<32x32xf32>
    %54 = vector.broadcast %30 : vector<1x32xf32> to vector<32x32xf32>
    %55 = arith.mulf %53, %54 : vector<32x32xf32>
    %56 = vector.broadcast %31 : vector<1x32xf32> to vector<32x32xf32>
    %57 = arith.addf %55, %56 : vector<32x32xf32>
    %58 = vector.extract_strided_slice %57 {offsets = [0, 0], sizes = [1, 32], strides = [1, 1]} : vector<32x32xf32> to vector<1x32xf32>
    %59 = vector.extract_strided_slice %57 {offsets = [8, 0], sizes = [1, 32], strides = [1, 1]} : vector<32x32xf32> to vector<1x32xf32>
    %60 = vector.extract_strided_slice %57 {offsets = [16, 0], sizes = [1, 32], strides = [1, 1]} : vector<32x32xf32> to vector<1x32xf32>
    %61 = vector.extract_strided_slice %57 {offsets = [24, 0], sizes = [1, 32], strides = [1, 1]} : vector<32x32xf32> to vector<1x32xf32>
    %62 = tpu.concatenate %58, %59, %60, %61 in 0 : vector<1x32xf32>, vector<1x32xf32>, vector<1x32xf32>, vector<1x32xf32> -> vector<4x32xf32>
    %c0_23 = arith.constant 0 : index
    %c0_24 = arith.constant 0 : index
    %63 = vector.load %arg2[%c0_23, %c0_24] : memref<65x64xf32, #tpu.memory_space<vmem>>, vector<32x64xf32>
    %c32_25 = arith.constant 32 : index
    %c0_26 = arith.constant 0 : index
    %64 = vector.load %arg2[%c32_25, %c0_26] : memref<65x64xf32, #tpu.memory_space<vmem>>, vector<32x64xf32>
    %c64 = arith.constant 64 : index
    %c0_27 = arith.constant 0 : index
    %65 = vector.load %arg2[%c64, %c0_27] : memref<65x64xf32, #tpu.memory_space<vmem>>, vector<1x64xf32>
    %cst_28 = arith.constant dense<0.000000e+00> : vector<4x64xf32>
    %66 = tpu.matmul %62, %63, %cst_28 {dimension_numbers = #tpu.dot_dimension_numbers<[1], [0], [0], [1], [0, 0, 1, 1], [], []>} : vector<4x32xf32>, vector<32x64xf32>, vector<4x64xf32> -> vector<4x64xf32>
    %67 = vector.broadcast %65 : vector<1x64xf32> to vector<4x64xf32>
    %68 = arith.addf %66, %67 : vector<4x64xf32>
    %69 = arith.mulf %68, %68 : vector<4x64xf32>
    %70 = arith.mulf %68, %69 : vector<4x64xf32>
    %cst_29 = arith.constant 4.471500e-02 : f32
    %71 = vector.broadcast %cst_29 : f32 to vector<4x64xf32>
    %72 = arith.mulf %71, %70 : vector<4x64xf32>
    %73 = arith.addf %68, %72 : vector<4x64xf32>
    %cst_30 = arith.constant 0.797884583 : f32
    %74 = vector.broadcast %cst_30 : f32 to vector<4x64xf32>
    %75 = arith.mulf %74, %73 : vector<4x64xf32>
    %76 = math.tanh %75 : vector<4x64xf32>
    %cst_31 = arith.constant 1.000000e+00 : f32
    %77 = vector.broadcast %cst_31 : f32 to vector<4x64xf32>
    %78 = arith.addf %77, %76 : vector<4x64xf32>
    %cst_32 = arith.constant 5.000000e-01 : f32
    %79 = vector.broadcast %cst_32 : f32 to vector<4x64xf32>
    %80 = arith.mulf %79, %78 : vector<4x64xf32>
    %81 = arith.mulf %68, %80 : vector<4x64xf32>
    %cst_33 = arith.constant dense<0.000000e+00> : vector<4x32xf32>
    %82 = tpu.matmul %81, %64, %cst_33 {dimension_numbers = #tpu.dot_dimension_numbers<[1], [1], [0], [0], [0, 0, 1, 0], [], []>} : vector<4x64xf32>, vector<32x64xf32>, vector<4x32xf32> -> vector<4x32xf32>
    %83 = vector.broadcast %32 : vector<1x32xf32> to vector<4x32xf32>
    %84 = arith.addf %82, %83 : vector<4x32xf32>
    %85 = arith.addf %62, %84 : vector<4x32xf32>
    %cst_34 = arith.constant dense<0.000000e+00> : vector<4xf32>
    %86 = vector.multi_reduction <add>, %85, %cst_34 [1] : vector<4x32xf32> to vector<4xf32>
    %87 = vector.shape_cast %86 : vector<4xf32> to vector<4x1xf32>
    %cst_35 = arith.constant 3.200000e+01 : f32
    %88 = vector.broadcast %cst_35 : f32 to vector<4x1xf32>
    %89 = arith.divf %87, %88 : vector<4x1xf32>
    %90 = vector.broadcast %89 : vector<4x1xf32> to vector<4x32xf32>
    %91 = arith.subf %85, %90 : vector<4x32xf32>
    %92 = arith.mulf %91, %91 : vector<4x32xf32>
    %cst_36 = arith.constant dense<0.000000e+00> : vector<4xf32>
    %93 = vector.multi_reduction <add>, %92, %cst_36 [1] : vector<4x32xf32> to vector<4xf32>
    %94 = vector.shape_cast %93 : vector<4xf32> to vector<4x1xf32>
    %cst_37 = arith.constant 3.200000e+01 : f32
    %95 = vector.broadcast %cst_37 : f32 to vector<4x1xf32>
    %96 = arith.divf %94, %95 : vector<4x1xf32>
    %97 = vector.broadcast %89 : vector<4x1xf32> to vector<4x32xf32>
    %98 = arith.subf %85, %97 : vector<4x32xf32>
    %cst_38 = arith.constant 9.99999974E-6 : f32
    %99 = vector.broadcast %cst_38 : f32 to vector<4x1xf32>
    %100 = arith.addf %96, %99 : vector<4x1xf32>
    %101 = math.rsqrt %100 : vector<4x1xf32>
    %102 = vector.broadcast %101 : vector<4x1xf32> to vector<4x32xf32>
    %103 = arith.mulf %98, %102 : vector<4x32xf32>
    %104 = vector.broadcast %33 : vector<1x32xf32> to vector<4x32xf32>
    %105 = arith.mulf %103, %104 : vector<4x32xf32>
    %106 = vector.broadcast %34 : vector<1x32xf32> to vector<4x32xf32>
    %107 = arith.addf %105, %106 : vector<4x32xf32>
    %108 = vector.extract_strided_slice %107 {offsets = [0, 0], sizes = [2, 32], strides = [1, 1]} : vector<4x32xf32> to vector<2x32xf32>
    %109 = vector.extract_strided_slice %107 {offsets = [2, 0], sizes = [2, 32], strides = [1, 1]} : vector<4x32xf32> to vector<2x32xf32>
    %110 = arith.mulf %108, %109 : vector<2x32xf32>
    %cst_39 = arith.constant dense<0.000000e+00> : vector<2xf32>
    %111 = vector.multi_reduction <add>, %110, %cst_39 [1] : vector<2x32xf32> to vector<2xf32>
    %112 = vector.shape_cast %111 : vector<2xf32> to vector<2x1xf32>
    %113 = arith.mulf %108, %108 : vector<2x32xf32>
    %cst_40 = arith.constant dense<0.000000e+00> : vector<2xf32>
    %114 = vector.multi_reduction <add>, %113, %cst_40 [1] : vector<2x32xf32> to vector<2xf32>
    %115 = vector.shape_cast %114 : vector<2xf32> to vector<2x1xf32>
    %116 = arith.mulf %109, %109 : vector<2x32xf32>
    %cst_41 = arith.constant dense<0.000000e+00> : vector<2xf32>
    %117 = vector.multi_reduction <add>, %116, %cst_41 [1] : vector<2x32xf32> to vector<2xf32>
    %118 = vector.shape_cast %117 : vector<2xf32> to vector<2x1xf32>
    %119 = arith.mulf %115, %118 : vector<2x1xf32>
    %cst_42 = arith.constant 1.000000e-16 : f32
    %120 = vector.broadcast %cst_42 : f32 to vector<2x1xf32>
    %121 = arith.maximumf %119, %120 : vector<2x1xf32>
    %122 = math.rsqrt %121 : vector<2x1xf32>
    %123 = arith.mulf %112, %122 : vector<2x1xf32>
    %124 = vector.shape_cast %123 : vector<2x1xf32> to vector<2x1xf32>
    %125 = vector.broadcast %124 : vector<2x1xf32> to vector<2x128xf32>
    %c0_43 = arith.constant 0 : index
    %c0_44 = arith.constant 0 : index
    %126 = vector.load %arg4[%c0_43, %c0_44] : memref<2x128xf32, #tpu.memory_space<vmem>>, vector<2x128xf32>
    tpu.vector_store %arg4[%c0_43, %c0_44], %125 {strides = array<i32>} : memref<2x128xf32, #tpu.memory_space<vmem>>, vector<2x128xf32>,
    return
  }
}

</mosaic_0001>

<llo_original>
// kernel: bi_encoder_forward.1
$region0: #{bi_encoder_forward.1}
  #allocation0 [shape = 'u32[]', space=smem, size = 0x4, offset = 0x4, fixed_abs, tag = 'smem constant byte address 0x4 - core index']
  #allocation1 [shape = 'u32[72,128]{1,0:T(1,128)}', space=vmem, size = 0x9000, scoped, tag = 'internal scratch']
  %s0 = inlined_call_operand.vmem [shape: f32[32,32], index: 0, kind: input, shape index: {}]
  %s1 = inlined_call_operand.vmem [shape: f32[33,128], index: 1, kind: input, shape index: {}]
  %s2 = inlined_call_operand.vmem [shape: f32[65,64], index: 2, kind: input, shape index: {}]
  %s3 = inlined_call_operand.vmem [shape: f32[5,32], index: 3, kind: input, shape index: {}]
  %s4 = inlined_call_operand.vmem [shape: f32[2,128], index: 4, kind: output, shape index: {}]
  %s5 = sld [smem:[#allocation0]]
  $region26: #{bi_encoder_forward.1} parent=0
    _
  %s7 = ssub.s32 1, %s5
  %s8 = scalar_select 0, %s7, %s5
  // Predicated region
  $region2: #{bi_encoder_forward.1} parent=0 // pred_check
    _
  $region3: #{bi_encoder_forward.1} parent=0 // pred_check_branch
    %10 = sbr.rel (0) target = $region5
  $region4: #{bi_encoder_forward.1} parent=0 // pred_region
    _
  $region5: #{bi_encoder_forward.1} parent=0 // pred_fallthru
    _
  // Predicated region
  $region6: #{bi_encoder_forward.1} parent=0 // pred_check
    _
  $region7: #{bi_encoder_forward.1} parent=0 // pred_check_branch
    %12 = sbr.rel (0) target = $region9
  $region8: #{bi_encoder_forward.1} parent=0 // pred_region
    _
  $region9: #{bi_encoder_forward.1} parent=0 // pred_fallthru
    _
  // Predicated region
  $region10: #{bi_encoder_forward.1} parent=0 // pred_check
    _
  $region11: #{bi_encoder_forward.1} parent=0 // pred_check_branch
    %14 = sbr.rel (0) target = $region13
  $region12: #{bi_encoder_forward.1} parent=0 // pred_region
    _
  $region13: #{bi_encoder_forward.1} parent=0 // pred_fallthru
    _
  // Predicated region
  $region14: #{bi_encoder_forward.1} parent=0 // pred_check
    _
  $region15: #{bi_encoder_forward.1} parent=0 // pred_check_branch
    %16 = sbr.rel (0) target = $region17
  $region16: #{bi_encoder_forward.1} parent=0 // pred_region
    _
  $region17: #{bi_encoder_forward.1} parent=0 // pred_fallthru
    _
  %v17 = vld [vmem:[%s0] sm:$0xff]
  %v18 = vld [vmem:[%s0 + $0x8] sm:$0xff]
  %v19 = vld [vmem:[%s0 + $0x10] sm:$0xff]
  %v20 = vld [vmem:[%s0 + $0x18] sm:$0xff]
  %v21 = vld [vmem:[%s1] sm:$0xff]
  %v22 = vld [vmem:[%s1 + $0x8] sm:$0xff]
  %v23 = vld [vmem:[%s1 + $0x10] sm:$0xff]
  %v24 = vld [vmem:[%s1 + $0x18] sm:$0xff]
  %v25 = vld [vmem:[%s1 + $0x20] sm:$0x1]
  %v26 = vperm.slane %v25, 0
  %vm27 = vcmask 261120
  %v29 = vsel %vm27, %v17, 0
  %v32 = vsel %vm27, %v18, 0
  %v35 = vsel %vm27, %v19, 0
  %v38 = vsel %vm27, %v20, 0
  %40 = vmatpush.msra.mxu0 0.0
  %41 = vmatpush.msra.mxu0 0.0
  %42 = vmatpush.msra.mxu0 0.0
  %43 = vmatpush.msra.mxu0 0.0
  %44 = vmatpush.msra.mxu0 0.0
  %45 = vmatpush.msra.mxu0 0.0
  %46 = vmatpush.msra.mxu0 0.0
  %47 = vmatpush.msra.mxu0 0.0
  %48 = vmatpush.msra.mxu0 0.0
  %49 = vmatpush.msra.mxu0 0.0
  %50 = vmatpush.msra.mxu0 0.0
  %51 = vmatpush.msra.mxu0 0.0
  %52 = vmatpush.msra.mxu0 %v24
  %53 = vmatpush.msra.mxu0 %v23
  %54 = vmatpush.msra.mxu0 %v22
  %55 = vmatpush.msra.mxu0 %v21
  %56 = vmatmul.f32.gmra.mxu0 %v29
  %v57 = vpop.f32.mrf.mxu0
  %v58 = vadd.f32 %v26, %v57
  %59 = vmatmul.f32.gmra.mxu0 %v32
  %v60 = vpop.f32.mrf.mxu0
  %v61 = vadd.f32 %v26, %v60
  %62 = vmatmul.f32.gmra.mxu0 %v35
  %v63 = vpop.f32.mrf.mxu0
  %v64 = vadd.f32 %v26, %v63
  %65 = vmatmul.f32.gmra.mxu0 %v38
  %v66 = vpop.f32.mrf.mxu0
  %v67 = vadd.f32 %v26, %v66
  %68 = vdwg.mxu0
  %70 = vrot.lane.b32.xlu0 %v58, 96
  %v71 = vpop.permute.xlu0 %70
  %v72 = vsel %vm27, %v58, 0
  %v74 = vsel %vm27, %v71, 0
  %76 = vmatpush.xpose.msra.mxu0 0.0
  %77 = vmatpush.xpose.msra.mxu0 0.0
  %78 = vmatpush.xpose.msra.mxu0 0.0
  %79 = vmatpush.xpose.msra.mxu0 0.0
  %80 = vmatpush.xpose.msra.mxu0 0.0
  %81 = vmatpush.xpose.msra.mxu0 0.0
  %82 = vmatpush.xpose.msra.mxu0 0.0
  %83 = vmatpush.xpose.msra.mxu0 0.0
  %84 = vmatpush.xpose.msra.mxu0 0.0
  %85 = vmatpush.xpose.msra.mxu0 0.0
  %86 = vmatpush.xpose.msra.mxu0 0.0
  %87 = vmatpush.xpose.msra.mxu0 0.0
  %88 = vmatpush.xpose.msra.mxu0 0.0
  %89 = vmatpush.xpose.msra.mxu0 0.0
  %90 = vmatpush.xpose.msra.mxu0 0.0
  %91 = vmatpush.xpose.msra.mxu0 %v74
  %92 = vmatmul.f32.gmra.mxu0 %v72
  %v93 = vpop.f32.mrf.mxu0
  %v94 = vadd.f32 0.0, %v93
  %95 = vdwg.mxu0
  %97 = vrot.lane.b32.xlu0 %v61, 96
  %v98 = vpop.permute.xlu0 %97
  %v99 = vsel %vm27, %v61, 0
  %v101 = vsel %vm27, %v98, 0
  %103 = vmatpush.xpose.msra.mxu0 0.0
  %104 = vmatpush.xpose.msra.mxu0 0.0
  %105 = vmatpush.xpose.msra.mxu0 0.0
  %106 = vmatpush.xpose.msra.mxu0 0.0
  %107 = vmatpush.xpose.msra.mxu0 0.0
  %108 = vmatpush.xpose.msra.mxu0 0.0
  %109 = vmatpush.xpose.msra.mxu0 0.0
  %110 = vmatpush.xpose.msra.mxu0 0.0
  %111 = vmatpush.xpose.msra.mxu0 0.0
  %112 = vmatpush.xpose.msra.mxu0 0.0
  %113 = vmatpush.xpose.msra.mxu0 0.0
  %114 = vmatpush.xpose.msra.mxu0 0.0
  %115 = vmatpush.xpose.msra.mxu0 0.0
  %116 = vmatpush.xpose.msra.mxu0 0.0
  %117 = vmatpush.xpose.msra.mxu0 0.0
  %118 = vmatpush.xpose.msra.mxu0 %v101
  %119 = vmatmul.f32.gmra.mxu0 %v99
  %v120 = vpop.f32.mrf.mxu0
  %v121 = vadd.f32 0.0, %v120
  %122 = vdwg.mxu0
  %124 = vrot.lane.b32.xlu0 %v64, 96
  %v125 = vpop.permute.xlu0 %124
  %v126 = vsel %vm27, %v64, 0
  %v128 = vsel %vm27, %v125, 0
  %130 = vmatpush.xpose.msra.mxu0 0.0
  %131 = vmatpush.xpose.msra.mxu0 0.0
  %132 = vmatpush.xpose.msra.mxu0 0.0
  %133 = vmatpush.xpose.msra.mxu0 0.0
  %134 = vmatpush.xpose.msra.mxu0 0.0
  %135 = vmatpush.xpose.msra.mxu0 0.0
  %136 = vmatpush.xpose.msra.mxu0 0.0
  %137 = vmatpush.xpose.msra.mxu0 0.0
  %138 = vmatpush.xpose.msra.mxu0 0.0
  %139 = vmatpush.xpose.msra.mxu0 0.0
  %140 = vmatpush.xpose.msra.mxu0 0.0
  %141 = vmatpush.xpose.msra.mxu0 0.0
  %142 = vmatpush.xpose.msra.mxu0 0.0
  %143 = vmatpush.xpose.msra.mxu0 0.0
  %144 = vmatpush.xpose.msra.mxu0 0.0
  %145 = vmatpush.xpose.msra.mxu0 %v128
  %146 = vmatmul.f32.gmra.mxu0 %v126
  %v147 = vpop.f32.mrf.mxu0
  %v148 = vadd.f32 0.0, %v147
  %149 = vdwg.mxu0
  %151 = vrot.lane.b32.xlu0 %v67, 96
  %v152 = vpop.permute.xlu0 %151
  %v153 = vsel %vm27, %v67, 0
  %v155 = vsel %vm27, %v152, 0
  %157 = vmatpush.xpose.msra.mxu0 0.0
  %158 = vmatpush.xpose.msra.mxu0 0.0
  %159 = vmatpush.xpose.msra.mxu0 0.0
  %160 = vmatpush.xpose.msra.mxu0 0.0
  %161 = vmatpush.xpose.msra.mxu0 0.0
  %162 = vmatpush.xpose.msra.mxu0 0.0
  %163 = vmatpush.xpose.msra.mxu0 0.0
  %164 = vmatpush.xpose.msra.mxu0 0.0
  %165 = vmatpush.xpose.msra.mxu0 0.0
  %166 = vmatpush.xpose.msra.mxu0 0.0
  %167 = vmatpush.xpose.msra.mxu0 0.0
  %168 = vmatpush.xpose.msra.mxu0 0.0
  %169 = vmatpush.xpose.msra.mxu0 0.0
  %170 = vmatpush.xpose.msra.mxu0 0.0
  %171 = vmatpush.xpose.msra.mxu0 0.0
  %172 = vmatpush.xpose.msra.mxu0 %v155
  %173 = vmatmul.f32.gmra.mxu0 %v153
  %v174 = vpop.f32.mrf.mxu0
  %v175 = vadd.f32 0.0, %v174
  %176 = vdwg.mxu0
  %vm177 = vcmask 64512
  %v178 = vsel %vm177, %v94, -inf
  %179 = vmax.xlane.f32.xlu0 %v178
  %v180 = vpop.xlane.xlu0 %179
  %v181 = vsel %vm177, %v121, -inf
  %182 = vmax.xlane.f32.xlu0 %v181
  %v183 = vpop.xlane.xlu0 %182
  %v184 = vsel %vm177, %v148, -inf
  %185 = vmax.xlane.f32.xlu0 %v184
  %v186 = vpop.xlane.xlu0 %185
  %v187 = vsel %vm177, %v175, -inf
  %188 = vmax.xlane.f32.xlu0 %v187
  %v189 = vpop.xlane.xlu0 %188
  %v190 = vsub.f32 %v94, %v180
  %v191 = vsub.f32 %v121, %v183
  %v192 = vsub.f32 %v148, %v186
  %v193 = vsub.f32 %v175, %v189
  %v194 = vmul.f32 %v190, 1.442695
  %v195 = vpow.pop %v194
  %v196 = vmul.f32 %v191, 1.442695
  %v197 = vpow.pop %v196
  %v198 = vmul.f32 %v192, 1.442695
  %v199 = vpow.pop %v198
  %v200 = vmul.f32 %v193, 1.442695
  %v201 = vpow.pop %v200
  %v202 = vsel %vm177, %v195, 0.0
  %203 = vadd.xlane.f32.xlu0 %v202
  %v204 = vpop.xlane.xlu0 %203
  %v205 = vsel %vm177, %v197, 0.0
  %206 = vadd.xlane.f32.xlu0 %v205
  %v207 = vpop.xlane.xlu0 %206
  %v208 = vsel %vm177, %v199, 0.0
  %209 = vadd.xlane.f32.xlu0 %v208
  %v210 = vpop.xlane.xlu0 %209
  %v211 = vsel %vm177, %v201, 0.0
  %212 = vadd.xlane.f32.xlu0 %v211
  %v213 = vpop.xlane.xlu0 %212
  %v214 = vrcp.pop %v204
  %v215 = vrcp.pop %v207
  %v216 = vrcp.pop %v210
  %v217 = vrcp.pop %v213
  %v218 = vmul.f32 %v195, %v214
  %v219 = vmul.f32 %v197, %v215
  %v220 = vmul.f32 %v199, %v216
  %v221 = vmul.f32 %v201, %v217
  %222 = vrot.lane.b32.xlu0 %v58, 64
  %v223 = vpop.permute.xlu0 %222
  %v226 = vsel %vm177, %v218, 0
  %228 = vmatpush.msra.mxu0 0.0
  %229 = vmatpush.msra.mxu0 0.0
  %230 = vmatpush.msra.mxu0 0.0
  %231 = vmatpush.msra.mxu0 0.0
  %232 = vmatpush.msra.mxu0 0.0
  %233 = vmatpush.msra.mxu0 0.0
  %234 = vmatpush.msra.mxu0 0.0
  %235 = vmatpush.msra.mxu0 0.0
  %236 = vmatpush.msra.mxu0 0.0
  %237 = vmatpush.msra.mxu0 0.0
  %238 = vmatpush.msra.mxu0 0.0
  %239 = vmatpush.msra.mxu0 0.0
  %240 = vmatpush.msra.mxu0 0.0
  %241 = vmatpush.msra.mxu0 0.0
  %242 = vmatpush.msra.mxu0 0.0
  %243 = vmatpush.msra.mxu0 %v223
  %244 = vmatmul.f32.gmra.mxu0 %v226
  %v245 = vpop.f32.mrf.mxu0
  %v246 = vadd.f32 0.0, %v245
  %247 = vdwg.mxu0
  %248 = vrot.lane.b32.xlu0 %v61, 64
  %v249 = vpop.permute.xlu0 %248
  %v252 = vsel %vm177, %v219, 0
  %254 = vmatpush.msra.mxu0 0.0
  %255 = vmatpush.msra.mxu0 0.0
  %256 = vmatpush.msra.mxu0 0.0
  %257 = vmatpush.msra.mxu0 0.0
  %258 = vmatpush.msra.mxu0 0.0
  %259 = vmatpush.msra.mxu0 0.0
  %260 = vmatpush.msra.mxu0 0.0
  %261 = vmatpush.msra.mxu0 0.0
  %262 = vmatpush.msra.mxu0 0.0
  %263 = vmatpush.msra.mxu0 0.0
  %264 = vmatpush.msra.mxu0 0.0
  %265 = vmatpush.msra.mxu0 0.0
  %266 = vmatpush.msra.mxu0 0.0
  %267 = vmatpush.msra.mxu0 0.0
  %268 = vmatpush.msra.mxu0 0.0
  %269 = vmatpush.msra.mxu0 %v249
  %270 = vmatmul.f32.gmra.mxu0 %v252
  %v271 = vpop.f32.mrf.mxu0
  %v272 = vadd.f32 0.0, %v271
  %273 = vdwg.mxu0
  %274 = vrot.lane.b32.xlu0 %v64, 64
  %v275 = vpop.permute.xlu0 %274
  %v278 = vsel %vm177, %v220, 0
  %280 = vmatpush.msra.mxu0 0.0
  %281 = vmatpush.msra.mxu0 0.0
  %282 = vmatpush.msra.mxu0 0.0
  %283 = vmatpush.msra.mxu0 0.0
  %284 = vmatpush.msra.mxu0 0.0
  %285 = vmatpush.msra.mxu0 0.0
  %286 = vmatpush.msra.mxu0 0.0
  %287 = vmatpush.msra.mxu0 0.0
  %288 = vmatpush.msra.mxu0 0.0
  %289 = vmatpush.msra.mxu0 0.0
  %290 = vmatpush.msra.mxu0 0.0
  %291 = vmatpush.msra.mxu0 0.0
  %292 = vmatpush.msra.mxu0 0.0
  %293 = vmatpush.msra.mxu0 0.0
  %294 = vmatpush.msra.mxu0 0.0
  %295 = vmatpush.msra.mxu0 %v275
  %296 = vmatmul.f32.gmra.mxu0 %v278
  %v297 = vpop.f32.mrf.mxu0
  %v298 = vadd.f32 0.0, %v297
  %299 = vdwg.mxu0
  %300 = vrot.lane.b32.xlu0 %v67, 64
  %v301 = vpop.permute.xlu0 %300
  %v304 = vsel %vm177, %v221, 0
  %306 = vmatpush.msra.mxu0 0.0
  %307 = vmatpush.msra.mxu0 0.0
  %308 = vmatpush.msra.mxu0 0.0
  %309 = vmatpush.msra.mxu0 0.0
  %310 = vmatpush.msra.mxu0 0.0
  %311 = vmatpush.msra.mxu0 0.0
  %312 = vmatpush.msra.mxu0 0.0
  %313 = vmatpush.msra.mxu0 0.0
  %314 = vmatpush.msra.mxu0 0.0
  %315 = vmatpush.msra.mxu0 0.0
  %316 = vmatpush.msra.mxu0 0.0
  %317 = vmatpush.msra.mxu0 0.0
  %318 = vmatpush.msra.mxu0 0.0
  %319 = vmatpush.msra.mxu0 0.0
  %320 = vmatpush.msra.mxu0 0.0
  %321 = vmatpush.msra.mxu0 %v301
  %322 = vmatmul.f32.gmra.mxu0 %v304
  %v323 = vpop.f32.mrf.mxu0
  %v324 = vadd.f32 0.0, %v323
  %325 = vdwg.mxu0
  %330 = vrot.lane.b32.xlu0 %v21, 32
  %v331 = vpop.permute.xlu0 %330
  %332 = vrot.lane.b32.xlu0 %v22, 32
  %v333 = vpop.permute.xlu0 %332
  %334 = vrot.lane.b32.xlu0 %v23, 32
  %v335 = vpop.permute.xlu0 %334
  %336 = vrot.lane.b32.xlu0 %v24, 32
  %v337 = vpop.permute.xlu0 %336
  %343 = vrot.lane.b32.xlu0 %v26, 32
  %v344 = vpop.permute.xlu0 %343
  %v347 = vsel %vm27, %v246, 0
  %v350 = vsel %vm27, %v272, 0
  %v353 = vsel %vm27, %v298, 0
  %v356 = vsel %vm27, %v324, 0
  %358 = vmatpush.msra.mxu0 0.0
  %359 = vmatpush.msra.mxu0 0.0
  %360 = vmatpush.msra.mxu0 0.0
  %361 = vmatpush.msra.mxu0 0.0
  %362 = vmatpush.msra.mxu0 0.0
  %363 = vmatpush.msra.mxu0 0.0
  %364 = vmatpush.msra.mxu0 0.0
  %365 = vmatpush.msra.mxu0 0.0
  %366 = vmatpush.msra.mxu0 0.0
  %367 = vmatpush.msra.mxu0 0.0
  %368 = vmatpush.msra.mxu0 0.0
  %369 = vmatpush.msra.mxu0 0.0
  %370 = vmatpush.msra.mxu0 %v337
  %371 = vmatpush.msra.mxu0 %v335
  %372 = vmatpush.msra.mxu0 %v333
  %373 = vmatpush.msra.mxu0 %v331
  %374 = vmatmul.f32.gmra.mxu0 %v347
  %v375 = vpop.f32.mrf.mxu0
  %v376 = vadd.f32 %v344, %v375
  %377 = vmatmul.f32.gmra.mxu0 %v350
  %v378 = vpop.f32.mrf.mxu0
  %v379 = vadd.f32 %v344, %v378
  %380 = vmatmul.f32.gmra.mxu0 %v353
  %v381 = vpop.f32.mrf.mxu0
  %v382 = vadd.f32 %v344, %v381
  %383 = vmatmul.f32.gmra.mxu0 %v356
  %v384 = vpop.f32.mrf.mxu0
  %v385 = vadd.f32 %v344, %v384
  %386 = vdwg.mxu0
  %v387 = vld [vmem:[%s3] sm:$0x1]
  %v388 = vld [vmem:[%s3 + $0x1] sm:$0x1]
  %v389 = vld [vmem:[%s3 + $0x2] sm:$0x1]
  %v390 = vld [vmem:[%s3 + $0x3] sm:$0x1]
  %v391 = vld [vmem:[%s3 + $0x4] sm:$0x1]
  %v392 = vadd.f32 %v17, %v376
  %v393 = vadd.f32 %v18, %v379
  %v394 = vadd.f32 %v19, %v382
  %v395 = vadd.f32 %v20, %v385
  %v396 = vsel %vm27, %v392, 0.0
  %397 = vadd.xlane.f32.xlu0 %v396
  %v398 = vpop.xlane.xlu0 %397
  %v399 = vsel %vm27, %v393, 0.0
  %400 = vadd.xlane.f32.xlu0 %v399
  %v401 = vpop.xlane.xlu0 %400
  %v402 = vsel %vm27, %v394, 0.0
  %403 = vadd.xlane.f32.xlu0 %v402
  %v404 = vpop.xlane.xlu0 %403
  %v405 = vsel %vm27, %v395, 0.0
  %406 = vadd.xlane.f32.xlu0 %v405
  %v407 = vpop.xlane.xlu0 %406
  %v408 = vrcp.pop 32.0
  %v409 = vmul.f32 32.0, %v408
  %v410 = vsub.f32 1.0, %v409
  %v411 = vmul.f32 %v408, %v410
  %v412 = vadd.f32 %v408, %v411
  %vm413 = vweird.f32 %v408
  %v414 = vsel %vm413, %v408, %v412
  %v415 = vmul.f32 %v398, %v414
  %v416 = vmul.f32 %v401, %v414
  %v417 = vmul.f32 %v404, %v414
  %v418 = vmul.f32 %v407, %v414
  %v419 = vsub.f32 %v392, %v415
  %v420 = vsub.f32 %v393, %v416
  %v421 = vsub.f32 %v394, %v417
  %v422 = vsub.f32 %v395, %v418
  %v423 = vmul.f32 %v419, %v419
  %v424 = vmul.f32 %v420, %v420
  %v425 = vmul.f32 %v421, %v421
  %v426 = vmul.f32 %v422, %v422
  %v427 = vsel %vm27, %v423, 0.0
  %428 = vadd.xlane.f32.xlu0 %v427
  %v429 = vpop.xlane.xlu0 %428
  %v430 = vsel %vm27, %v424, 0.0
  %431 = vadd.xlane.f32.xlu0 %v430
  %v432 = vpop.xlane.xlu0 %431
  %v433 = vsel %vm27, %v425, 0.0
  %434 = vadd.xlane.f32.xlu0 %v433
  %v435 = vpop.xlane.xlu0 %434
  %v436 = vsel %vm27, %v426, 0.0
  %437 = vadd.xlane.f32.xlu0 %v436
  %v438 = vpop.xlane.xlu0 %437
  %v439 = vmul.f32 %v429, %v414
  %v440 = vmul.f32 %v432, %v414
  %v441 = vmul.f32 %v435, %v414
  %v442 = vmul.f32 %v438, %v414
  %v443 = vadd.f32 %v439, 1e-05
  %v444 = vadd.f32 %v440, 1e-05
  %v445 = vadd.f32 %v441, 1e-05
  %v446 = vadd.f32 %v442, 1e-05
  %v447 = vrsqrt.pop %v443
  %v448 = vmul.f32 %v447, %v443
  %v449 = vmul.f32 %v448, %v447
  %v450 = vmul.f32 0.5, %v449
  %v451 = vsub.f32 1.5, %v450
  %v452 = vmul.f32 %v447, %v451
  %vm453 = vweird.f32 %v443
  %vm454 = vweird.f32 %v447
  %vm455 = vmor %vm453, %vm454
  %v456 = vsel %vm455, %v447, %v452
  %v457 = vrsqrt.pop %v444
  %v458 = vmul.f32 %v457, %v444
  %v459 = vmul.f32 %v458, %v457
  %v460 = vmul.f32 0.5, %v459
  %v461 = vsub.f32 1.5, %v460
  %v462 = vmul.f32 %v457, %v461
  %vm463 = vweird.f32 %v444
  %vm464 = vweird.f32 %v457
  %vm465 = vmor %vm463, %vm464
  %v466 = vsel %vm465, %v457, %v462
  %v467 = vrsqrt.pop %v445
  %v468 = vmul.f32 %v467, %v445
  %v469 = vmul.f32 %v468, %v467
  %v470 = vmul.f32 0.5, %v469
  %v471 = vsub.f32 1.5, %v470
  %v472 = vmul.f32 %v467, %v471
  %vm473 = vweird.f32 %v445
  %vm474 = vweird.f32 %v467
  %vm475 = vmor %vm473, %vm474
  %v476 = vsel %vm475, %v467, %v472
  %v477 = vrsqrt.pop %v446
  %v478 = vmul.f32 %v477, %v446
  %v479 = vmul.f32 %v478, %v477
  %v480 = vmul.f32 0.5, %v479
  %v481 = vsub.f32 1.5, %v480
  %v482 = vmul.f32 %v477, %v481
  %vm483 = vweird.f32 %v446
  %vm484 = vweird.f32 %v477
  %vm485 = vmor %vm483, %vm484
  %v486 = vsel %vm485, %v477, %v482
  %v487 = vmul.f32 %v419, %v456
  %v488 = vmul.f32 %v420, %v466
  %v489 = vmul.f32 %v421, %v476
  %v490 = vmul.f32 %v422, %v486
  %v491 = vperm.slane %v387, 0
  %v492 = vmul.f32 %v487, %v491
  %v493 = vmul.f32 %v488, %v491
  %v494 = vmul.f32 %v489, %v491
  %v495 = vmul.f32 %v490, %v491
  %v496 = vperm.slane %v388, 0
  %v497 = vadd.f32 %v492, %v496
  %v498 = vadd.f32 %v493, %v496
  %v499 = vadd.f32 %v494, %v496
  %v500 = vadd.f32 %v495, %v496
  %v502 = vrot.slane %v498, 7
  %v505 = vrot.slane %v499, 6
  %v508 = vrot.slane %v500, 5
  %vm510 = vcmask 1040384
  %v511 = vsel %vm510, %v497, %v502
  %vm512 = vcmask 1041408
  %v513 = vsel %vm512, %v511, %v505
  %vm514 = vcmask 1042432
  %v515 = vsel %vm514, %v513, %v508
  %v516 = vld [vmem:[%s2] sm:$0xff]
  %v517 = vld [vmem:[%s2 + $0x8] sm:$0xff]
  %v518 = vld [vmem:[%s2 + $0x10] sm:$0xff]
  %v519 = vld [vmem:[%s2 + $0x18] sm:$0xff]
  %v520 = vld [vmem:[%s2 + $0x20] sm:$0xff]
  %v521 = vld [vmem:[%s2 + $0x28] sm:$0xff]
  %v522 = vld [vmem:[%s2 + $0x30] sm:$0xff]
  %v523 = vld [vmem:[%s2 + $0x38] sm:$0xff]
  %v524 = vld [vmem:[%s2 + $0x40] sm:$0x1]
  %v525 = vperm.slane %v524, 0
  %v527 = vsel %vm27, %v515, 0
  %529 = vmatpush.msra.mxu0 0.0
  %530 = vmatpush.msra.mxu0 0.0
  %531 = vmatpush.msra.mxu0 0.0
  %532 = vmatpush.msra.mxu0 0.0
  %533 = vmatpush.msra.mxu0 0.0
  %534 = vmatpush.msra.mxu0 0.0
  %535 = vmatpush.msra.mxu0 0.0
  %536 = vmatpush.msra.mxu0 0.0
  %537 = vmatpush.msra.mxu0 0.0
  %538 = vmatpush.msra.mxu0 0.0
  %539 = vmatpush.msra.mxu0 0.0
  %540 = vmatpush.msra.mxu0 0.0
  %541 = vmatpush.msra.mxu0 %v519
  %542 = vmatpush.msra.mxu0 %v518
  %543 = vmatpush.msra.mxu0 %v517
  %544 = vmatpush.msra.mxu0 %v516
  %545 = vmatmul.f32.gmra.mxu0 %v527
  %v546 = vpop.f32.mrf.mxu0
  %v547 = vadd.f32 %v525, %v546
  %548 = vdwg.mxu0
  %v549 = vmul.f32 %v547, %v547
  %v550 = vmul.f32 %v547, %v549
  %v551 = vmul.f32 %v550, 0.044715
  %v552 = vadd.f32 %v547, %v551
  %v553 = vmul.f32 %v552, 0.7978846
  %v554 = vtanh.pop %v553
  %v555 = vadd.f32 %v554, 1.0
  %v556 = vmul.f32 %v555, 0.5
  %v557 = vmul.f32 %v547, %v556
  %v558 = vperm.slane %v389, 0
  %vm559 = vcmask 523264
  %v561 = vsel %vm559, %v557, 0
  %v564 = vsel %vm559, %v520, 0
  %v567 = vsel %vm559, %v521, 0
  %v570 = vsel %vm559, %v522, 0
  %v573 = vsel %vm559, %v523, 0
  %575 = vmatpush.xpose.msra.mxu0 0.0
  %576 = vmatpush.xpose.msra.mxu0 0.0
  %577 = vmatpush.xpose.msra.mxu0 0.0
  %578 = vmatpush.xpose.msra.mxu0 0.0
  %579 = vmatpush.xpose.msra.mxu0 0.0
  %580 = vmatpush.xpose.msra.mxu0 0.0
  %581 = vmatpush.xpose.msra.mxu0 0.0
  %582 = vmatpush.xpose.msra.mxu0 0.0
  %583 = vmatpush.xpose.msra.mxu0 0.0
  %584 = vmatpush.xpose.msra.mxu0 0.0
  %585 = vmatpush.xpose.msra.mxu0 0.0
  %586 = vmatpush.xpose.msra.mxu0 0.0
  %587 = vmatpush.xpose.msra.mxu0 %v573
  %588 = vmatpush.xpose.msra.mxu0 %v570
  %589 = vmatpush.xpose.msra.mxu0 %v567
  %590 = vmatpush.xpose.msra.mxu0 %v564
  %591 = vmatmul.f32.gmra.mxu0 %v561
  %v592 = vpop.f32.mrf.mxu0
  %v593 = vadd.f32 %v558, %v592
  %594 = vdwg.mxu0
  %v595 = vadd.f32 %v515, %v593
  %vm596 = vcmask 257024
  %v597 = vsel %vm596, %v595, 0.0
  %598 = vadd.xlane.f32.xlu0 %v597
  %v599 = vpop.xlane.xlu0 %598
  %v600 = vmul.f32 %v599, %v414
  %v601 = vsub.f32 %v595, %v600
  %v602 = vmul.f32 %v601, %v601
  %v603 = vsel %vm596, %v602, 0.0
  %604 = vadd.xlane.f32.xlu0 %v603
  %v605 = vpop.xlane.xlu0 %604
  %v606 = vmul.f32 %v605, %v414
  %v607 = vadd.f32 %v606, 1e-05
  %v608 = vrsqrt.pop %v607
  %v609 = vmul.f32 %v608, %v607
  %v610 = vmul.f32 %v609, %v608
  %v611 = vmul.f32 0.5, %v610
  %v612 = vsub.f32 1.5, %v611
  %v613 = vmul.f32 %v608, %v612
  %vm614 = vweird.f32 %v607
  %vm615 = vweird.f32 %v608
  %vm616 = vmor %vm614, %vm615
  %v617 = vsel %vm616, %v608, %v613
  %v618 = vmul.f32 %v601, %v617
  %v619 = vperm.slane %v390, 0
  %v620 = vmul.f32 %v618, %v619
  %v621 = vperm.slane %v391, 0
  %v622 = vadd.f32 %v620, %v621
  %v624 = vrot.slane %v622, 2
  %v626 = vmul.f32 %v622, %v624
  %vm627 = vcmask 254976
  %v628 = vsel %vm627, %v626, 0.0
  %629 = vadd.xlane.f32.xlu0 %v628
  %v630 = vpop.xlane.xlu0 %629
  %v631 = vmul.f32 %v622, %v622
  %v632 = vsel %vm627, %v631, 0.0
  %633 = vadd.xlane.f32.xlu0 %v632
  %v634 = vpop.xlane.xlu0 %633
  %vm635 = vcmask 257026
  %v636 = vsel %vm635, %v631, 0.0
  %637 = vadd.xlane.f32.xlu0 %v636
  %v638 = vpop.xlane.xlu0 %637
  %v640 = vrot.slane %v638, 2
  %v642 = vmul.f32 %v634, %v640
  %v643 = vmax.f32 %v642, 1e-16
  %v644 = vrsqrt.pop %v643
  %v645 = vmul.f32 %v644, %v643
  %v646 = vmul.f32 %v645, %v644
  %v647 = vmul.f32 0.5, %v646
  %v648 = vsub.f32 1.5, %v647
  %v649 = vmul.f32 %v644, %v648
  %vm650 = vweird.f32 %v643
  %vm651 = vweird.f32 %v644
  %vm652 = vmor %vm650, %vm651
  %v653 = vsel %vm652, %v644, %v649
  %v654 = vmul.f32 %v630, %v653
  %656 = vset.pattern.permute.xlu0 0
  %657 = vperm.xlu0 %656, %v654
  %v658 = vpop.permute.xlu0 %657
  %660 = vst [vmem:[%s4] sm:$0x3] %v658
  // Predicated region
  $region18: #{bi_encoder_forward.1} parent=0 // pred_check
    _
  $region19: #{bi_encoder_forward.1} parent=0 // pred_check_branch
    %662 = sbr.rel (0) target = $region21
  $region20: #{bi_encoder_forward.1} parent=0 // pred_region
    _
  $region21: #{bi_encoder_forward.1} parent=0 // pred_fallthru
    _
  // Predicated region
  $region22: #{bi_encoder_forward.1} parent=0 // pred_check
    _
  $region23: #{bi_encoder_forward.1} parent=0 // pred_check_branch
    %664 = sbr.rel (0) target = $region25
  $region24: #{bi_encoder_forward.1} parent=0 // pred_region
    _
  $region25: #{bi_encoder_forward.1} parent=0 // pred_fallthru
    _

</llo_original>
